<compile_context>
chip_gen: v5e
topology: v5e:2x2
jax: 0.10.0
libtpu: 0.0.40
codegen_flags: <defaults>
</compile_context>

<pallas_src>
import math

import jax
import jax.numpy as jnp
from jax import lax
from jax.experimental import pallas as pl
from jax.experimental.pallas import tpu as pltpu


def _round_up(x, m):
    return (x + m - 1) // m * m


# ---------------------------------------------------------------------------
# Kernels
# ---------------------------------------------------------------------------

def _linear_kernel_full_k(x_ref, w_ref, b_ref, o_ref):
    """y = x @ W + b with the whole feature dim in one block (common path).

    x_ref: (TB, F)      f32  (cast to compute dtype in-kernel -> no extra HBM pass)
    w_ref: (F, O_pad)   compute dtype, VMEM-resident (same block every step)
    b_ref: (1, O_pad)   f32
    o_ref: (TB, O_pad)  f32
    """
    x = x_ref[...].astype(w_ref.dtype)
    acc = lax.dot_general(
        x, w_ref[...],
        dimension_numbers=(((1,), (0,)), ((), ())),
        preferred_element_type=jnp.float32,
    )
    o_ref[...] = acc + b_ref[...]


def _linear_kernel_k_tiled(x_ref, w_ref, b_ref, o_ref):
    """K-reduction fallback for very large F.

    Accumulates directly into the resident f32 output block (out BlockSpec
    keeps the same block across the K axis), so there is no scratch buffer
    and no separate zero-init pass.
    """
    k = pl.program_id(1)
    x = x_ref[...].astype(w_ref.dtype)
    part = lax.dot_general(
        x, w_ref[...],
        dimension_numbers=(((1,), (0,)), ((), ())),
        preferred_element_type=jnp.float32,
    )

    @pl.when(k == 0)
    def _():
        o_ref[...] = part + b_ref[...]

    @pl.when(k != 0)
    def _():
        o_ref[...] = o_ref[...] + part


# ---------------------------------------------------------------------------
# Wrapper
# ---------------------------------------------------------------------------

def softmax_regression_forward(x_nchw, weight, bias, *,
                               compute_dtype=jnp.bfloat16,
                               tb=1024, tk=2048,
                               force_k_tiling=False):
    """Forward pass of SoftmaxRegression (Flatten -> Linear).

    x_nchw: (B, C, H, W) f32 (NCHW; flattened row-major like nn.Flatten)
    weight: (O, F) f32 (torch nn.Linear layout)
    bias:   (O,)   f32
    returns (B, O) f32

    Note: compute_dtype=bf16 rounds x/W before the MXU (f32 accumulation);
    pass compute_dtype=jnp.float32 for a bit-faithful f32 Linear.
    """
    B = x_nchw.shape[0]
    O, F = weight.shape
    assert math.prod(x_nchw.shape[1:]) == F, "weight in_features must match flattened x"

    o_pad = _round_up(O, 128)                 # lane-dense output / weight minor dim
    isz_c = jnp.dtype(compute_dtype).itemsize

    # ---- VMEM budget (generation-aware) -----------------------------------
    try:
        phys_vmem = int(pltpu.get_tpu_info().vmem_capacity_bytes)
    except Exception:
        phys_vmem = 64 * 1024 * 1024          # v7x-safe fallback
    budget = phys_vmem * 3 // 4               # ~96 MiB v5e/v6e, ~48 MiB v7x

    # ---- Batch tiling -------------------------------------------------------
    tb_req = max(8, _round_up(tb, 8))
    if B <= tb_req:
        if B >= 1024:
            # Split in two so v7x's second TensorCore has work (nb >= 2).
            tb_eff = _round_up(-(-B // 2), 8)
            b_pad = _round_up(B, tb_eff)
        else:
            tb_eff, b_pad = B, B              # full-extent tile, no batch pad
    else:
        tb_eff = tb_req
        b_pad = _round_up(B, tb_eff)
    nb = b_pad // tb_eff

    # ---- Feature (K) tiling -------------------------------------------------
    def _need_single():
        return (2 * tb_eff * F * 4            # x double buffer (f32)
                + 2 * F * o_pad * isz_c       # weight (resident; count db to be safe)
                + 2 * o_pad * 4               # bias
                + 2 * tb_eff * o_pad * 4)     # out double buffer

    def _need_ktiled(tke):
        return (2 * tb_eff * tke * 4
                + 2 * tke * o_pad * isz_c
                + 2 * o_pad * 4
                + 2 * tb_eff * o_pad * 4)

    use_single = (not force_k_tiling) and _need_single() <= budget

    if use_single:
        f_pad, tk_eff, nk = F, F, 1
        vmem_need = _need_single()
    else:
        tk_eff = _round_up(min(max(tk, 128), max(F, 128)), 128)
        while tk_eff > 512 and _need_ktiled(tk_eff) > budget:
            tk_eff = _round_up(tk_eff // 2, 128)
        f_pad = _round_up(F, tk_eff)
        nk = f_pad // tk_eff
        vmem_need = _need_ktiled(tk_eff)

    vmem_limit = max(min(max(vmem_need * 3 // 2, 8 * 1024 * 1024), budget), vmem_need)

    # ---- Operand prep (x stays f32; cast happens inside the kernel) --------
    x_flat = x_nchw.reshape(B, F)             # nn.Flatten: free row-major reshape
    if b_pad != B or f_pad != F:
        # Only the large-F / padded-batch fallback pays this extra pad pass.
        x_p = jnp.pad(x_flat, ((0, b_pad - B), (0, f_pad - F)))
    else:
        x_p = x_flat

    # Weight is tiny: one-time transpose to (F, O), pad O to a 128-lane
    # multiple and (if K-tiled) F to a tk multiple, cast to compute dtype.
    w_p = jnp.pad(weight.astype(compute_dtype).T,
                  ((0, f_pad - F), (0, o_pad - O)))
    b_p = jnp.pad(bias.astype(jnp.float32), (0, o_pad - O)).reshape(1, o_pad)

    # ---- Cost hint (W re-streamed nb times only in the K-tiled fallback) ---
    w_reads = 1 if use_single else nb
    cost = pl.CostEstimate(
        flops=2 * b_pad * f_pad * o_pad,
        transcendentals=0,
        bytes_accessed=(x_p.size * 4 + w_p.size * isz_c * w_reads
                        + b_p.size * 4 + b_pad * o_pad * 4),
    )

    out_shape = jax.ShapeDtypeStruct((b_pad, o_pad), jnp.float32)

    if use_single:
        kernel = _linear_kernel_full_k
        grid = (nb,)
        in_specs = [
            pl.BlockSpec((tb_eff, F), lambda i: (i, 0)),       # x tile (f32)
            pl.BlockSpec((F, o_pad), lambda i: (0, 0)),        # W resident
            pl.BlockSpec((1, o_pad), lambda i: (0, 0)),        # bias
        ]
        out_specs = pl.BlockSpec((tb_eff, o_pad), lambda i: (i, 0))
        dims = ("parallel",)
    else:
        kernel = _linear_kernel_k_tiled
        grid = (nb, nk)                                         # reduction axis last
        in_specs = [
            pl.BlockSpec((tb_eff, tk_eff), lambda i, k: (i, k)),
            pl.BlockSpec((tk_eff, o_pad), lambda i, k: (k, 0)),
            pl.BlockSpec((1, o_pad), lambda i, k: (0, 0)),
        ]
        out_specs = pl.BlockSpec((tb_eff, o_pad), lambda i, k: (i, 0))
        dims = ("parallel", "arbitrary")

    out = pl.pallas_call(
        kernel,
        out_shape=out_shape,
        grid_spec=pltpu.PrefetchScalarGridSpec(
            num_scalar_prefetch=0,
            grid=grid,
            in_specs=in_specs,
            out_specs=out_specs,
        ),
        compiler_params=pltpu.CompilerParams(
            dimension_semantics=dims,
            vmem_limit_bytes=int(vmem_limit),
        ),
        cost_estimate=cost,
    )(x_p, w_p, b_p)

    return out[:B, :O]


def init_params(key, num_features, num_outputs):
    """Deterministic init mimicking nn.Linear default (kaiming-uniform-ish)."""
    kw, kb = jax.random.split(key)
    bound = 1.0 / math.sqrt(num_features)
    weight = jax.random.uniform(
        kw, (num_outputs, num_features), jnp.float32, -bound, bound)
    bias = jax.random.uniform(
        kb, (num_outputs,), jnp.float32, -bound, bound)
    return weight, bias


if __name__ == "__main__":
    key = jax.random.PRNGKey(0)
    kx, kp = jax.random.split(key)

    # Small example shapes consistent with the module's forward (NCHW input).
    B, C, H, W = 2, 4, 16, 16
    num_outputs = 10
    num_features = C * H * W            # 1024

    x = jax.random.normal(kx, (B, C, H, W), jnp.float32)
    weight, bias = init_params(kp, num_features, num_outputs)

    y_ref = x.reshape(B, -1) @ weight.T + bias

    # --- f32 compute, whole-F resident fast path: matches the PyTorch Linear.
    y_f32 = jax.block_until_ready(
        softmax_regression_forward(x, weight, bias, compute_dtype=jnp.float32))
    assert y_f32.shape == (B, num_outputs)
    assert jnp.allclose(y_f32, y_ref, atol=1e-4, rtol=1e-4)

    # --- f32 compute, forced K-tiled fallback path (exercises the reduction).
    y_f32_kt = jax.block_until_ready(
        softmax_regression_forward(x, weight, bias, compute_dtype=jnp.float32,
                                   tk=256, force_k_tiling=True))
    assert jnp.allclose(y_f32_kt, y_ref, atol=1e-4, rtol=1e-4)

    # --- bf16 MXU inputs (f32 accumulation): compare against a reference
    #     computed with the same bf16 input rounding.
    y_bf16 = jax.block_until_ready(
        softmax_regression_forward(x, weight, bias, compute_dtype=jnp.bfloat16))
    x_b = x.reshape(B, -1).astype(jnp.bfloat16).astype(jnp.float32)
    w_b = weight.astype(jnp.bfloat16).astype(jnp.float32)
    y_ref_b = x_b @ w_b.T + bias
    assert y_bf16.shape == (B, num_outputs)
    assert jnp.allclose(y_bf16, y_ref_b, atol=1e-3, rtol=1e-3)

    print("KERNEL_OK")
</pallas_src>

<mosaic_0001>
module attributes {stable_mosaic.version = 11 : i64} {
  func.func @_linear_kernel_full_k(%arg0: i32, %arg1: memref<2x1024xf32, #tpu.memory_space<vmem>>, %arg2: memref<1024x128xf32, #tpu.memory_space<vmem>>, %arg3: memref<1x128xf32, #tpu.memory_space<vmem>>, %arg4: memref<2x128xf32, #tpu.memory_space<vmem>>) attributes {dimension_semantics = [#tpu.dimension_semantics<parallel>], iteration_bounds = array<i64: 1>, scalar_prefetch = 0 : i64, scratch_operands = 0 : i64, tpu.core_type = #tpu.core_type<tc>, window_params = [{transform_indices = @transform_0, window_bounds = array<i64: 2, 1024>}, {pipeline_mode = #tpu.pipeline_mode<synchronous>, transform_indices = @transform_1, window_bounds = array<i64: 1024, 128>}, {pipeline_mode = #tpu.pipeline_mode<synchronous>, transform_indices = @transform_2, window_bounds = array<i64: 1, 128>}, {transform_indices = @transform_3, window_bounds = array<i64: 2, 128>}]} {
    %c0 = arith.constant 0 : index
    %c0_0 = arith.constant 0 : index
    %0 = vector.load %arg1[%c0, %c0_0] : memref<2x1024xf32, #tpu.memory_space<vmem>>, vector<2x1024xf32>
    %c0_1 = arith.constant 0 : index
    %c0_2 = arith.constant 0 : index
    %1 = vector.load %arg2[%c0_1, %c0_2] : memref<1024x128xf32, #tpu.memory_space<vmem>>, vector<1024x128xf32>
    %cst = arith.constant dense<0.000000e+00> : vector<2x128xf32>
    %2 = tpu.matmul %0, %1, %cst {dimension_numbers = #tpu.dot_dimension_numbers<[1], [0], [0], [1], [0, 0, 1, 1], [], []>} : vector<2x1024xf32>, vector<1024x128xf32>, vector<2x128xf32> -> vector<2x128xf32>
    %c0_3 = arith.constant 0 : index
    %c0_4 = arith.constant 0 : index
    %3 = vector.load %arg3[%c0_3, %c0_4] : memref<1x128xf32, #tpu.memory_space<vmem>>, vector<1x128xf32>
    %4 = vector.broadcast %3 : vector<1x128xf32> to vector<2x128xf32>
    %5 = arith.addf %2, %4 : vector<2x128xf32>
    %c0_5 = arith.constant 0 : index
    %c0_6 = arith.constant 0 : index
    %6 = vector.load %arg4[%c0_5, %c0_6] : memref<2x128xf32, #tpu.memory_space<vmem>>, vector<2x128xf32>
    tpu.vector_store %arg4[%c0_5, %c0_6], %5 {strides = array<i32>} : memref<2x128xf32, #tpu.memory_space<vmem>>, vector<2x128xf32>,
    return
  }
  func.func @transform_0(%arg0: i32) -> (i32, i32) {
    %c0_i32 = arith.constant 0 : i32
    %c0_i32_0 = arith.constant 0 : i32
    return %arg0, %c0_i32 : i32, i32
  }
  func.func @transform_1(%arg0: i32) -> (i32, i32) {
    %c0_i32 = arith.constant 0 : i32
    %c0_i32_0 = arith.constant 0 : i32
    %c0_i32_1 = arith.constant 0 : i32
    return %c0_i32, %c0_i32_0 : i32, i32
  }
  func.func @transform_2(%arg0: i32) -> (i32, i32) {
    %c0_i32 = arith.constant 0 : i32
    %c0_i32_0 = arith.constant 0 : i32
    %c0_i32_1 = arith.constant 0 : i32
    return %c0_i32, %c0_i32_0 : i32, i32
  }
  func.func @transform_3(%arg0: i32) -> (i32, i32) {
    %c0_i32 = arith.constant 0 : i32
    %c0_i32_0 = arith.constant 0 : i32
    return %arg0, %c0_i32 : i32, i32
  }
}

</mosaic_0001>

<llo_original>
// kernel: tpu_custom_call.1
$region0: #{tpu_custom_call.1}
  #allocation0 [shape = 'u32[]', space=smem, size = 0x4, offset = 0x4, fixed_abs, tag = 'smem constant byte address 0x4 - core index']
  #allocation1 [shape = 'u32[72,128]{1,0:T(1,128)}', space=vmem, size = 0x9000, scoped, tag = 'internal scratch']
  %s0 = inlined_call_operand.hbm [shape: f32[2,1024], index: 0, kind: input, shape index: {}]
  %s1 = inlined_call_operand.hbm [shape: f32[1024,128], index: 1, kind: input, shape index: {}]
  %s2 = inlined_call_operand.vmem [shape: f32[1,128], index: 2, kind: input, shape index: {}]
  %s3 = inlined_call_operand.hbm [shape: f32[2,128], index: 3, kind: output, shape index: {}]
  %s4 = sld [smem:[#allocation0]]
  $region30: #{tpu_custom_call.1} parent=0
    _
  %s6 = ssub.s32 1, %s4
  %s7 = scalar_select 0, %s6, %s4
  $region1: #{tpu_custom_call.1} parent=0
    #allocation2 [shape = 'u8[8192]{0}', space=vmem, size = 0x2000, scoped, tag = 'input window, operand 0, single buffered']
    #allocation3 [shape = 's32[1]{0}', space=sflag, size = 0x4, scoped, tag = 'scoped memory for tpu_custom_call.1']
    #allocation4 [shape = 's32[1]{0}', space=sflag, size = 0x4, scoped, tag = 'scoped memory for tpu_custom_call.1']
    #allocation5 [shape = 'u8[524288]{0}', space=vmem, size = 0x80000, scoped, tag = 'input window, operand 1, single buffered']
    #allocation6 [shape = 's32[1]{0}', space=sflag, size = 0x4, scoped, tag = 'scoped memory for tpu_custom_call.1']
    #allocation7 [shape = 'u8[1024]{0}', space=vmem, size = 0x400, scoped, tag = 'output window, operand 0, single buffered']
    %8 = vsyncpa [#allocation3], 0
    %9 = vsyncpa [#allocation6], 0
    %10 = vsyncpa [#allocation4], 0
    // Predicated region
    $region2: #{tpu_custom_call.1} parent=1 // pred_check
      _
    $region3: #{tpu_custom_call.1} parent=1 // pred_check_branch
      %12 = sbr.rel (0) target = $region5
    $region4: #{tpu_custom_call.1} parent=1 // pred_region
      %14 = vsyncadd [#allocation3], 0
      %s16 = sshll.u32 %s0, 4
      %s17 = int_to_ptr.hbm [resolvable:$true] %s16
      %s18 = sshll.u32 [#allocation2], 4
      %s19 = int_to_ptr.vmem [resolvable:$true] %s18
      %21 = dma.hbm_to_vmem [thread:$0]  %s17, 256, %s19, [#allocation3]
    $region5: #{tpu_custom_call.1} parent=1 // pred_fallthru
      _
    // Predicated region
    $region6: #{tpu_custom_call.1} parent=1 // pred_check
      _
    $region7: #{tpu_custom_call.1} parent=1 // pred_check_branch
      %23 = sbr.rel (0) target = $region9
    $region8: #{tpu_custom_call.1} parent=1 // pred_region
      %25 = vsyncadd [#allocation6], 0
      %s26 = sshll.u32 %s1, 4
      %s27 = int_to_ptr.hbm [resolvable:$true] %s26
      %s28 = sshll.u32 [#allocation5], 4
      %s29 = int_to_ptr.vmem [resolvable:$true] %s28
      %34 = dma.hbm_to_vmem [thread:$0]  %s27, 16384, %s29, [#allocation6], 128, 128, 8
    $region9: #{tpu_custom_call.1} parent=1 // pred_fallthru
      _
    // Predicated region
    $region10: #{tpu_custom_call.1} parent=1 // pred_check
      _
    $region11: #{tpu_custom_call.1} parent=1 // pred_check_branch
      %36 = sbr.rel (0) target = $region13
    $region12: #{tpu_custom_call.1} parent=1 // pred_region
      _
    $region13: #{tpu_custom_call.1} parent=1 // pred_fallthru
      _
    // Predicated region
    $region14: #{tpu_custom_call.1} parent=1 // pred_check
      _
    $region15: #{tpu_custom_call.1} parent=1 // pred_check_branch
      %38 = sbr.rel (0) target = $region17
    $region16: #{tpu_custom_call.1} parent=1 // pred_region
      %40 = dma.done [#allocation3], 256
    $region17: #{tpu_custom_call.1} parent=1 // pred_fallthru
      _
    // Predicated region
    $region18: #{tpu_custom_call.1} parent=1 // pred_check
      _
    $region19: #{tpu_custom_call.1} parent=1 // pred_check_branch
      %42 = sbr.rel (0) target = $region21
    $region20: #{tpu_custom_call.1} parent=1 // pred_region
      %44 = dma.done [#allocation6], 16384
    $region21: #{tpu_custom_call.1} parent=1 // pred_fallthru
      _
    %v45 = vld [vmem:[#allocation2] sm:$0xff]
    %v46 = vld [vmem:[#allocation2 + $0x8] sm:$0xff]
    %v47 = vld [vmem:[#allocation5] sm:$0xff]
    %v48 = vld [vmem:[#allocation5 + $0x8] sm:$0xff]
    %v49 = vld [vmem:[#allocation5 + $0x10] sm:$0xff]
    %v50 = vld [vmem:[#allocation5 + $0x18] sm:$0xff]
    %v51 = vld [vmem:[#allocation5 + $0x20] sm:$0xff]
    %v52 = vld [vmem:[#allocation5 + $0x28] sm:$0xff]
    %v53 = vld [vmem:[#allocation5 + $0x30] sm:$0xff]
    %v54 = vld [vmem:[#allocation5 + $0x38] sm:$0xff]
    %v55 = vld [vmem:[#allocation5 + $0x40] sm:$0xff]
    %v56 = vld [vmem:[#allocation5 + $0x48] sm:$0xff]
    %v57 = vld [vmem:[#allocation5 + $0x50] sm:$0xff]
    %v58 = vld [vmem:[#allocation5 + $0x58] sm:$0xff]
    %v59 = vld [vmem:[#allocation5 + $0x60] sm:$0xff]
    %v60 = vld [vmem:[#allocation5 + $0x68] sm:$0xff]
    %v61 = vld [vmem:[#allocation5 + $0x70] sm:$0xff]
    %v62 = vld [vmem:[#allocation5 + $0x78] sm:$0xff]
    %v63 = vld [vmem:[#allocation5 + $0x80] sm:$0xff]
    %v64 = vld [vmem:[#allocation5 + $0x88] sm:$0xff]
    %v65 = vld [vmem:[#allocation5 + $0x90] sm:$0xff]
    %v66 = vld [vmem:[#allocation5 + $0x98] sm:$0xff]
    %v67 = vld [vmem:[#allocation5 + $0xa0] sm:$0xff]
    %v68 = vld [vmem:[#allocation5 + $0xa8] sm:$0xff]
    %v69 = vld [vmem:[#allocation5 + $0xb0] sm:$0xff]
    %v70 = vld [vmem:[#allocation5 + $0xb8] sm:$0xff]
    %v71 = vld [vmem:[#allocation5 + $0xc0] sm:$0xff]
    %v72 = vld [vmem:[#allocation5 + $0xc8] sm:$0xff]
    %v73 = vld [vmem:[#allocation5 + $0xd0] sm:$0xff]
    %v74 = vld [vmem:[#allocation5 + $0xd8] sm:$0xff]
    %v75 = vld [vmem:[#allocation5 + $0xe0] sm:$0xff]
    %v76 = vld [vmem:[#allocation5 + $0xe8] sm:$0xff]
    %v77 = vld [vmem:[#allocation5 + $0xf0] sm:$0xff]
    %v78 = vld [vmem:[#allocation5 + $0xf8] sm:$0xff]
    %v79 = vld [vmem:[#allocation5 + $0x100] sm:$0xff]
    %v80 = vld [vmem:[#allocation5 + $0x108] sm:$0xff]
    %v81 = vld [vmem:[#allocation5 + $0x110] sm:$0xff]
    %v82 = vld [vmem:[#allocation5 + $0x118] sm:$0xff]
    %v83 = vld [vmem:[#allocation5 + $0x120] sm:$0xff]
    %v84 = vld [vmem:[#allocation5 + $0x128] sm:$0xff]
    %v85 = vld [vmem:[#allocation5 + $0x130] sm:$0xff]
    %v86 = vld [vmem:[#allocation5 + $0x138] sm:$0xff]
    %v87 = vld [vmem:[#allocation5 + $0x140] sm:$0xff]
    %v88 = vld [vmem:[#allocation5 + $0x148] sm:$0xff]
    %v89 = vld [vmem:[#allocation5 + $0x150] sm:$0xff]
    %v90 = vld [vmem:[#allocation5 + $0x158] sm:$0xff]
    %v91 = vld [vmem:[#allocation5 + $0x160] sm:$0xff]
    %v92 = vld [vmem:[#allocation5 + $0x168] sm:$0xff]
    %v93 = vld [vmem:[#allocation5 + $0x170] sm:$0xff]
    %v94 = vld [vmem:[#allocation5 + $0x178] sm:$0xff]
    %v95 = vld [vmem:[#allocation5 + $0x180] sm:$0xff]
    %v96 = vld [vmem:[#allocation5 + $0x188] sm:$0xff]
    %v97 = vld [vmem:[#allocation5 + $0x190] sm:$0xff]
    %v98 = vld [vmem:[#allocation5 + $0x198] sm:$0xff]
    %v99 = vld [vmem:[#allocation5 + $0x1a0] sm:$0xff]
    %v100 = vld [vmem:[#allocation5 + $0x1a8] sm:$0xff]
    %v101 = vld [vmem:[#allocation5 + $0x1b0] sm:$0xff]
    %v102 = vld [vmem:[#allocation5 + $0x1b8] sm:$0xff]
    %v103 = vld [vmem:[#allocation5 + $0x1c0] sm:$0xff]
    %v104 = vld [vmem:[#allocation5 + $0x1c8] sm:$0xff]
    %v105 = vld [vmem:[#allocation5 + $0x1d0] sm:$0xff]
    %v106 = vld [vmem:[#allocation5 + $0x1d8] sm:$0xff]
    %v107 = vld [vmem:[#allocation5 + $0x1e0] sm:$0xff]
    %v108 = vld [vmem:[#allocation5 + $0x1e8] sm:$0xff]
    %v109 = vld [vmem:[#allocation5 + $0x1f0] sm:$0xff]
    %v110 = vld [vmem:[#allocation5 + $0x1f8] sm:$0xff]
    %v111 = vld [vmem:[#allocation5 + $0x200] sm:$0xff]
    %v112 = vld [vmem:[#allocation5 + $0x208] sm:$0xff]
    %v113 = vld [vmem:[#allocation5 + $0x210] sm:$0xff]
    %v114 = vld [vmem:[#allocation5 + $0x218] sm:$0xff]
    %v115 = vld [vmem:[#allocation5 + $0x220] sm:$0xff]
    %v116 = vld [vmem:[#allocation5 + $0x228] sm:$0xff]
    %v117 = vld [vmem:[#allocation5 + $0x230] sm:$0xff]
    %v118 = vld [vmem:[#allocation5 + $0x238] sm:$0xff]
    %v119 = vld [vmem:[#allocation5 + $0x240] sm:$0xff]
    %v120 = vld [vmem:[#allocation5 + $0x248] sm:$0xff]
    %v121 = vld [vmem:[#allocation5 + $0x250] sm:$0xff]
    %v122 = vld [vmem:[#allocation5 + $0x258] sm:$0xff]
    %v123 = vld [vmem:[#allocation5 + $0x260] sm:$0xff]
    %v124 = vld [vmem:[#allocation5 + $0x268] sm:$0xff]
    %v125 = vld [vmem:[#allocation5 + $0x270] sm:$0xff]
    %v126 = vld [vmem:[#allocation5 + $0x278] sm:$0xff]
    %v127 = vld [vmem:[#allocation5 + $0x280] sm:$0xff]
    %v128 = vld [vmem:[#allocation5 + $0x288] sm:$0xff]
    %v129 = vld [vmem:[#allocation5 + $0x290] sm:$0xff]
    %v130 = vld [vmem:[#allocation5 + $0x298] sm:$0xff]
    %v131 = vld [vmem:[#allocation5 + $0x2a0] sm:$0xff]
    %v132 = vld [vmem:[#allocation5 + $0x2a8] sm:$0xff]
    %v133 = vld [vmem:[#allocation5 + $0x2b0] sm:$0xff]
    %v134 = vld [vmem:[#allocation5 + $0x2b8] sm:$0xff]
    %v135 = vld [vmem:[#allocation5 + $0x2c0] sm:$0xff]
    %v136 = vld [vmem:[#allocation5 + $0x2c8] sm:$0xff]
    %v137 = vld [vmem:[#allocation5 + $0x2d0] sm:$0xff]
    %v138 = vld [vmem:[#allocation5 + $0x2d8] sm:$0xff]
    %v139 = vld [vmem:[#allocation5 + $0x2e0] sm:$0xff]
    %v140 = vld [vmem:[#allocation5 + $0x2e8] sm:$0xff]
    %v141 = vld [vmem:[#allocation5 + $0x2f0] sm:$0xff]
    %v142 = vld [vmem:[#allocation5 + $0x2f8] sm:$0xff]
    %v143 = vld [vmem:[#allocation5 + $0x300] sm:$0xff]
    %v144 = vld [vmem:[#allocation5 + $0x308] sm:$0xff]
    %v145 = vld [vmem:[#allocation5 + $0x310] sm:$0xff]
    %v146 = vld [vmem:[#allocation5 + $0x318] sm:$0xff]
    %v147 = vld [vmem:[#allocation5 + $0x320] sm:$0xff]
    %v148 = vld [vmem:[#allocation5 + $0x328] sm:$0xff]
    %v149 = vld [vmem:[#allocation5 + $0x330] sm:$0xff]
    %v150 = vld [vmem:[#allocation5 + $0x338] sm:$0xff]
    %v151 = vld [vmem:[#allocation5 + $0x340] sm:$0xff]
    %v152 = vld [vmem:[#allocation5 + $0x348] sm:$0xff]
    %v153 = vld [vmem:[#allocation5 + $0x350] sm:$0xff]
    %v154 = vld [vmem:[#allocation5 + $0x358] sm:$0xff]
    %v155 = vld [vmem:[#allocation5 + $0x360] sm:$0xff]
    %v156 = vld [vmem:[#allocation5 + $0x368] sm:$0xff]
    %v157 = vld [vmem:[#allocation5 + $0x370] sm:$0xff]
    %v158 = vld [vmem:[#allocation5 + $0x378] sm:$0xff]
    %v159 = vld [vmem:[#allocation5 + $0x380] sm:$0xff]
    %v160 = vld [vmem:[#allocation5 + $0x388] sm:$0xff]
    %v161 = vld [vmem:[#allocation5 + $0x390] sm:$0xff]
    %v162 = vld [vmem:[#allocation5 + $0x398] sm:$0xff]
    %v163 = vld [vmem:[#allocation5 + $0x3a0] sm:$0xff]
    %v164 = vld [vmem:[#allocation5 + $0x3a8] sm:$0xff]
    %v165 = vld [vmem:[#allocation5 + $0x3b0] sm:$0xff]
    %v166 = vld [vmem:[#allocation5 + $0x3b8] sm:$0xff]
    %v167 = vld [vmem:[#allocation5 + $0x3c0] sm:$0xff]
    %v168 = vld [vmem:[#allocation5 + $0x3c8] sm:$0xff]
    %v169 = vld [vmem:[#allocation5 + $0x3d0] sm:$0xff]
    %v170 = vld [vmem:[#allocation5 + $0x3d8] sm:$0xff]
    %v171 = vld [vmem:[#allocation5 + $0x3e0] sm:$0xff]
    %v172 = vld [vmem:[#allocation5 + $0x3e8] sm:$0xff]
    %v173 = vld [vmem:[#allocation5 + $0x3f0] sm:$0xff]
    %v174 = vld [vmem:[#allocation5 + $0x3f8] sm:$0xff]
    %v175 = vld [vmem:[%s2] sm:$0x1]
    %v177 = vperm.slane %v175, 0
    %181 = vst [vmem:[#allocation1] ss:$4 sm:$0xff] %v45
    %s182 = scalar_lea.vmem [#allocation1], 32
    %183 = vst [vmem:[%s182] ss:$4 sm:$0xff] %v46
    %v184 = vld.sshfl [vmem:[#allocation1] sm:$0xff pattern:$0x73625140]
    %v185 = vld.sshfl [vmem:[#allocation1 + $0x8] sm:$0xff pattern:$0x73625140]
    %v186 = vld.sshfl [vmem:[#allocation1 + $0x10] sm:$0xff pattern:$0x73625140]
    %v187 = vld.sshfl [vmem:[#allocation1 + $0x18] sm:$0xff pattern:$0x73625140]
    %v188 = vld.sshfl [vmem:[#allocation1 + $0x20] sm:$0xff pattern:$0x73625140]
    %v189 = vld.sshfl [vmem:[#allocation1 + $0x28] sm:$0xff pattern:$0x73625140]
    %v190 = vld.sshfl [vmem:[#allocation1 + $0x30] sm:$0xff pattern:$0x73625140]
    %v191 = vld.sshfl [vmem:[#allocation1 + $0x38] sm:$0xff pattern:$0x73625140]
    %200 = vmatpush.msra.mxu0 %v62
    %201 = vmatpush.msra.mxu0 %v61
    %202 = vmatpush.msra.mxu0 %v60
    %203 = vmatpush.msra.mxu0 %v59
    %204 = vmatpush.msra.mxu0 %v58
    %205 = vmatpush.msra.mxu0 %v57
    %206 = vmatpush.msra.mxu0 %v56
    %207 = vmatpush.msra.mxu0 %v55
    %208 = vmatpush.msra.mxu0 %v54
    %209 = vmatpush.msra.mxu0 %v53
    %210 = vmatpush.msra.mxu0 %v52
    %211 = vmatpush.msra.mxu0 %v51
    %212 = vmatpush.msra.mxu0 %v50
    %213 = vmatpush.msra.mxu0 %v49
    %214 = vmatpush.msra.mxu0 %v48
    %215 = vmatpush.msra.mxu0 %v47
    %216 = vmatmul.f32.gmra.mxu0 %v184
    %v217 = vpop.f32.mrf.mxu0
    %v218 = vadd.f32 %v177, %v217
    %219 = vdwg.mxu0
    %220 = vmatpush.msra.mxu0 %v78
    %221 = vmatpush.msra.mxu0 %v77
    %222 = vmatpush.msra.mxu0 %v76
    %223 = vmatpush.msra.mxu0 %v75
    %224 = vmatpush.msra.mxu0 %v74
    %225 = vmatpush.msra.mxu0 %v73
    %226 = vmatpush.msra.mxu0 %v72
    %227 = vmatpush.msra.mxu0 %v71
    %228 = vmatpush.msra.mxu0 %v70
    %229 = vmatpush.msra.mxu0 %v69
    %230 = vmatpush.msra.mxu0 %v68
    %231 = vmatpush.msra.mxu0 %v67
    %232 = vmatpush.msra.mxu0 %v66
    %233 = vmatpush.msra.mxu0 %v65
    %234 = vmatpush.msra.mxu0 %v64
    %235 = vmatpush.msra.mxu0 %v63
    %236 = vmatmul.f32.gmra.mxu0 %v185
    %v237 = vpop.f32.mrf.mxu0
    %v238 = vadd.f32 %v218, %v237
    %239 = vdwg.mxu0
    %240 = vmatpush.msra.mxu0 %v94
    %241 = vmatpush.msra.mxu0 %v93
    %242 = vmatpush.msra.mxu0 %v92
    %243 = vmatpush.msra.mxu0 %v91
    %244 = vmatpush.msra.mxu0 %v90
    %245 = vmatpush.msra.mxu0 %v89
    %246 = vmatpush.msra.mxu0 %v88
    %247 = vmatpush.msra.mxu0 %v87
    %248 = vmatpush.msra.mxu0 %v86
    %249 = vmatpush.msra.mxu0 %v85
    %250 = vmatpush.msra.mxu0 %v84
    %251 = vmatpush.msra.mxu0 %v83
    %252 = vmatpush.msra.mxu0 %v82
    %253 = vmatpush.msra.mxu0 %v81
    %254 = vmatpush.msra.mxu0 %v80
    %255 = vmatpush.msra.mxu0 %v79
    %256 = vmatmul.f32.gmra.mxu0 %v186
    %v257 = vpop.f32.mrf.mxu0
    %v258 = vadd.f32 %v238, %v257
    %259 = vdwg.mxu0
    %260 = vmatpush.msra.mxu0 %v110
    %261 = vmatpush.msra.mxu0 %v109
    %262 = vmatpush.msra.mxu0 %v108
    %263 = vmatpush.msra.mxu0 %v107
    %264 = vmatpush.msra.mxu0 %v106
    %265 = vmatpush.msra.mxu0 %v105
    %266 = vmatpush.msra.mxu0 %v104
    %267 = vmatpush.msra.mxu0 %v103
    %268 = vmatpush.msra.mxu0 %v102
    %269 = vmatpush.msra.mxu0 %v101
    %270 = vmatpush.msra.mxu0 %v100
    %271 = vmatpush.msra.mxu0 %v99
    %272 = vmatpush.msra.mxu0 %v98
    %273 = vmatpush.msra.mxu0 %v97
    %274 = vmatpush.msra.mxu0 %v96
    %275 = vmatpush.msra.mxu0 %v95
    %276 = vmatmul.f32.gmra.mxu0 %v187
    %v277 = vpop.f32.mrf.mxu0
    %v278 = vadd.f32 %v258, %v277
    %279 = vdwg.mxu0
    %280 = vmatpush.msra.mxu0 %v126
    %281 = vmatpush.msra.mxu0 %v125
    %282 = vmatpush.msra.mxu0 %v124
    %283 = vmatpush.msra.mxu0 %v123
    %284 = vmatpush.msra.mxu0 %v122
    %285 = vmatpush.msra.mxu0 %v121
    %286 = vmatpush.msra.mxu0 %v120
    %287 = vmatpush.msra.mxu0 %v119
    %288 = vmatpush.msra.mxu0 %v118
    %289 = vmatpush.msra.mxu0 %v117
    %290 = vmatpush.msra.mxu0 %v116
    %291 = vmatpush.msra.mxu0 %v115
    %292 = vmatpush.msra.mxu0 %v114
    %293 = vmatpush.msra.mxu0 %v113
    %294 = vmatpush.msra.mxu0 %v112
    %295 = vmatpush.msra.mxu0 %v111
    %296 = vmatmul.f32.gmra.mxu0 %v188
    %v297 = vpop.f32.mrf.mxu0
    %v298 = vadd.f32 %v278, %v297
    %299 = vdwg.mxu0
    %300 = vmatpush.msra.mxu0 %v142
    %301 = vmatpush.msra.mxu0 %v141
    %302 = vmatpush.msra.mxu0 %v140
    %303 = vmatpush.msra.mxu0 %v139
    %304 = vmatpush.msra.mxu0 %v138
    %305 = vmatpush.msra.mxu0 %v137
    %306 = vmatpush.msra.mxu0 %v136
    %307 = vmatpush.msra.mxu0 %v135
    %308 = vmatpush.msra.mxu0 %v134
    %309 = vmatpush.msra.mxu0 %v133
    %310 = vmatpush.msra.mxu0 %v132
    %311 = vmatpush.msra.mxu0 %v131
    %312 = vmatpush.msra.mxu0 %v130
    %313 = vmatpush.msra.mxu0 %v129
    %314 = vmatpush.msra.mxu0 %v128
    %315 = vmatpush.msra.mxu0 %v127
    %316 = vmatmul.f32.gmra.mxu0 %v189
    %v317 = vpop.f32.mrf.mxu0
    %v318 = vadd.f32 %v298, %v317
    %319 = vdwg.mxu0
    %320 = vmatpush.msra.mxu0 %v158
    %321 = vmatpush.msra.mxu0 %v157
    %322 = vmatpush.msra.mxu0 %v156
    %323 = vmatpush.msra.mxu0 %v155
    %324 = vmatpush.msra.mxu0 %v154
    %325 = vmatpush.msra.mxu0 %v153
    %326 = vmatpush.msra.mxu0 %v152
    %327 = vmatpush.msra.mxu0 %v151
    %328 = vmatpush.msra.mxu0 %v150
    %329 = vmatpush.msra.mxu0 %v149
    %330 = vmatpush.msra.mxu0 %v148
    %331 = vmatpush.msra.mxu0 %v147
    %332 = vmatpush.msra.mxu0 %v146
    %333 = vmatpush.msra.mxu0 %v145
    %334 = vmatpush.msra.mxu0 %v144
    %335 = vmatpush.msra.mxu0 %v143
    %336 = vmatmul.f32.gmra.mxu0 %v190
    %v337 = vpop.f32.mrf.mxu0
    %v338 = vadd.f32 %v318, %v337
    %339 = vdwg.mxu0
    %340 = vmatpush.msra.mxu0 %v174
    %341 = vmatpush.msra.mxu0 %v173
    %342 = vmatpush.msra.mxu0 %v172
    %343 = vmatpush.msra.mxu0 %v171
    %344 = vmatpush.msra.mxu0 %v170
    %345 = vmatpush.msra.mxu0 %v169
    %346 = vmatpush.msra.mxu0 %v168
    %347 = vmatpush.msra.mxu0 %v167
    %348 = vmatpush.msra.mxu0 %v166
    %349 = vmatpush.msra.mxu0 %v165
    %350 = vmatpush.msra.mxu0 %v164
    %351 = vmatpush.msra.mxu0 %v163
    %352 = vmatpush.msra.mxu0 %v162
    %353 = vmatpush.msra.mxu0 %v161
    %354 = vmatpush.msra.mxu0 %v160
    %355 = vmatpush.msra.mxu0 %v159
    %356 = vmatmul.f32.gmra.mxu0 %v191
    %v357 = vpop.f32.mrf.mxu0
    %v358 = vadd.f32 %v338, %v357
    %359 = vdwg.mxu0
    %360 = vst [vmem:[#allocation7] sm:$0x3] %v358
    // Predicated region
    $region22: #{tpu_custom_call.1} parent=1 // pred_check
      _
    $region23: #{tpu_custom_call.1} parent=1 // pred_check_branch
      %362 = sbr.rel (0) target = $region25
    $region24: #{tpu_custom_call.1} parent=1 // pred_region
      %364 = vsyncadd [#allocation4], 0
      %s366 = sshll.u32 [#allocation7], 4
      %s367 = int_to_ptr.vmem [resolvable:$true] %s366
      %s368 = sshll.u32 %s3, 4
      %s369 = int_to_ptr.hbm [resolvable:$true] %s368
      %371 = dma.vmem_to_hbm [thread:$0]  %s367, 32, %s369, [#allocation4]
    $region25: #{tpu_custom_call.1} parent=1 // pred_fallthru
      _
    // Predicated region
    $region26: #{tpu_custom_call.1} parent=1 // pred_check
      _
    $region27: #{tpu_custom_call.1} parent=1 // pred_check_branch
      %373 = sbr.rel (0) target = $region29
    $region28: #{tpu_custom_call.1} parent=1 // pred_region
      %375 = dma.done [#allocation4], 32
    $region29: #{tpu_custom_call.1} parent=1 // pred_fallthru
      _
    %376 = vsyncpa [#allocation3], 1
    %377 = vsyncpa [#allocation6], 1
    %378 = vsyncpa [#allocation4], 1

</llo_original>
